<compile_context>
chip_gen: v5e
topology: v5e:2x2
jax: 0.10.0
libtpu: 0.0.40
codegen_flags: <defaults>
</compile_context>

<pallas_src>
import math

import jax
import jax.numpy as jnp
import numpy as np
from jax.experimental import pallas as pl
from jax.experimental.pallas import tpu as pltpu


# --------------------------- parameter init --------------------------------

def split_half(n):
    return n - n // 2, n // 2


def trunc_normal(key, shape, std, dtype=jnp.float32):
    # matches torch.nn.init.trunc_normal_(std=std, a=-2*std, b=2*std)
    return (std * jax.random.truncated_normal(key, -2.0, 2.0, shape)).astype(dtype)


def init_hodlr(key, in_features, out_features, min_block_size, rank,
               bias=True, std=0.02, dtype=jnp.float32):
    """Nested param dict.  Leaf weights are stored PRE-TRANSPOSED as (in, out)
    so the forward never materializes weight.T."""
    params = {"in": in_features, "out": out_features}
    params["bias"] = jnp.zeros((out_features,), dtype) if bias else None

    if min(in_features, out_features) < 2 * min_block_size:
        params["last_layer"] = True
        params["weight_t"] = trunc_normal(key, (in_features, out_features), std, dtype)
        return params

    params["last_layer"] = False
    r = min(rank, in_features // 2, out_features // 2)
    i1, i2 = split_half(in_features)
    o1, o2 = split_half(out_features)
    k11, k22, ku12, kv12, ku21, kv21 = jax.random.split(key, 6)
    params["a11"] = init_hodlr(k11, i1, o1, min_block_size, rank,
                               bias=False, std=std, dtype=dtype)
    params["a22"] = init_hodlr(k22, i2, o2, min_block_size, rank,
                               bias=False, std=std, dtype=dtype)
    std_r = std / math.sqrt(r)
    params["u12"] = trunc_normal(ku12, (i1, r), std_r, dtype)
    params["v12"] = trunc_normal(kv12, (r, o2), std_r, dtype)
    params["u21"] = trunc_normal(ku21, (i2, r), std_r, dtype)
    params["v21"] = trunc_normal(kv21, (r, o1), std_r, dtype)
    return params


# ------------------- flatten the tree into a weight list -------------------

def _flatten_tree(params, leaves):
    node = {"last_layer": params["last_layer"],
            "in": params["in"], "out": params["out"]}
    if params["last_layer"]:
        node["w"] = len(leaves)
        leaves.append(params["weight_t"])
        return node
    for name in ("u12", "v12", "u21", "v21"):
        node[name] = len(leaves)
        leaves.append(params[name])
    node["a11"] = _flatten_tree(params["a11"], leaves)
    node["a22"] = _flatten_tree(params["a22"], leaves)
    node["i1"] = params["a11"]["in"]          # ceil-half (torch.chunk convention)
    return node


# ----------------------------- fused kernel --------------------------------

def _apply_node(node, x, w_refs):
    """Unrolled HODLR apply on an in-register (tm, in) tile."""
    f32 = jnp.float32
    if node["last_layer"]:
        return jnp.dot(x, w_refs[node["w"]][...], preferred_element_type=f32)

    i1 = node["i1"]
    x1 = x[:, :i1]
    x2 = x[:, i1:]
    u12 = w_refs[node["u12"]][...]
    v12 = w_refs[node["v12"]][...]
    u21 = w_refs[node["u21"]][...]
    v21 = w_refs[node["v21"]][...]

    # cast the rank-R intermediate back to the weight dtype so a bf16 config
    # never produces a mixed-dtype dot (f32 accumulation kept throughout).
    t21 = jnp.dot(x2, u21, preferred_element_type=f32).astype(v21.dtype)
    t12 = jnp.dot(x1, u12, preferred_element_type=f32).astype(v12.dtype)

    y1 = _apply_node(node["a11"], x1, w_refs) + jnp.dot(
        t21, v21, preferred_element_type=f32)
    y2 = jnp.dot(t12, v12, preferred_element_type=f32) + _apply_node(
        node["a22"], x2, w_refs)
    return jnp.concatenate([y1, y2], axis=-1)


def _make_kernel(tree, n_weights, has_bias):
    def kernel(*refs):
        x_ref = refs[0]
        w_refs = refs[1:1 + n_weights]
        bias_ref = refs[1 + n_weights] if has_bias else None
        o_ref = refs[-1]

        x = x_ref[...]
        y = _apply_node(tree, x, w_refs)
        if bias_ref is not None:
            y = y + bias_ref[...].astype(y.dtype)      # fused bias add
        o_ref[...] = y.astype(o_ref.dtype)             # single lane-dense store
    return kernel


# ------------------------------- forward -----------------------------------

def hodlr_forward(params, x, *, tm_max=512, vmem_budget=24 << 20):
    """x: (..., in_features) -> (..., out_features). One fused pallas_call."""
    lead = x.shape[:-1]
    K = x.shape[-1]
    N = params["out"]
    M = int(np.prod(lead)) if lead else 1
    x2d = x.reshape(M, K)

    leaves = []
    tree = _flatten_tree(params, leaves)
    has_bias = params["bias"] is not None

    itemsize = x2d.dtype.itemsize
    weight_bytes = sum(int(np.prod(w.shape)) * w.dtype.itemsize for w in leaves)

    # Pick the largest M tile that fits a v7x-safe VMEM budget
    # (2x double-buffered x/out tiles + all weights resident).
    def est(t):
        return weight_bytes + 2 * t * (K + N) * itemsize + (2 << 20)

    tm = min(M, tm_max)
    while tm > 8 and est(tm) > vmem_budget:
        tm = max(8, ((tm // 2) // 8) * 8)   # keep sublane (8) divisibility

    grid = (pl.cdiv(M, tm),)

    in_specs = [pl.BlockSpec((tm, K), lambda i: (i, 0))]
    in_specs += [pl.BlockSpec(w.shape, lambda i: (0, 0)) for w in leaves]
    inputs = [x2d] + list(leaves)
    if has_bias:
        in_specs.append(pl.BlockSpec((1, N), lambda i: (0, 0)))
        inputs.append(params["bias"].reshape(1, N))
    out_spec = pl.BlockSpec((tm, N), lambda i: (i, 0))

    kernel = _make_kernel(tree, len(leaves), has_bias)
    vmem_limit = int(min(max(2 * est(tm), 16 << 20), 64 << 20))

    y2d = pl.pallas_call(
        kernel,
        out_shape=jax.ShapeDtypeStruct((M, N), x2d.dtype),
        grid=grid,
        in_specs=in_specs,
        out_specs=out_spec,
        compiler_params=pltpu.CompilerParams(
            dimension_semantics=("parallel",),   # shard M tiles across TCs (v7x)
            vmem_limit_bytes=vmem_limit,
        ),
    )(*inputs)
    return y2d.reshape(*lead, N)


# ---------------------- pure-JAX reference (no Pallas) ----------------------

def hodlr_reference(params, x):
    if params["last_layer"]:
        y = x @ params["weight_t"]
    else:
        i1 = params["a11"]["in"]
        x1, x2 = x[..., :i1], x[..., i1:]
        y1 = hodlr_reference(params["a11"], x1) + x2 @ params["u21"] @ params["v21"]
        y2 = x1 @ params["u12"] @ params["v12"] + hodlr_reference(params["a22"], x2)
        y = jnp.concatenate([y1, y2], axis=-1)
    if params["bias"] is not None:
        y = y + params["bias"]
    return y


# --------------------------------- main -------------------------------------

if __name__ == "__main__":
    # TODO(synk): project_from (SVD-based weight import) is an offline init
    # utility and is not part of the forward pass; not implemented here.
    in_features, out_features = 32, 32
    min_block_size, rank = 8, 4
    batch, seq = 2, 8

    root_key = jax.random.PRNGKey(0)
    pkey, xkey = jax.random.split(root_key)
    params = init_hodlr(pkey, in_features, out_features, min_block_size, rank,
                        bias=True)

    x = jax.random.normal(xkey, (batch, seq, in_features), dtype=jnp.float32)

    fwd = jax.jit(lambda xx: hodlr_forward(params, xx))
    y = fwd(x)
    jax.block_until_ready(y)

    y_ref = hodlr_reference(params, x)
    np.testing.assert_allclose(np.asarray(y), np.asarray(y_ref),
                               rtol=1e-3, atol=1e-4)
    assert y.shape == (batch, seq, out_features)
    print("KERNEL_OK")
</pallas_src>

<mosaic_0001>
module attributes {stable_mosaic.version = 11 : i64} {
  func.func @kernel(%arg0: i32, %arg1: memref<16x32xf32, #tpu.memory_space<vmem>>, %arg2: memref<16x4xf32, #tpu.memory_space<vmem>>, %arg3: memref<4x16xf32, #tpu.memory_space<vmem>>, %arg4: memref<16x4xf32, #tpu.memory_space<vmem>>, %arg5: memref<4x16xf32, #tpu.memory_space<vmem>>, %arg6: memref<8x4xf32, #tpu.memory_space<vmem>>, %arg7: memref<4x8xf32, #tpu.memory_space<vmem>>, %arg8: memref<8x4xf32, #tpu.memory_space<vmem>>, %arg9: memref<4x8xf32, #tpu.memory_space<vmem>>, %arg10: memref<8x8xf32, #tpu.memory_space<vmem>>, %arg11: memref<8x8xf32, #tpu.memory_space<vmem>>, %arg12: memref<8x4xf32, #tpu.memory_space<vmem>>, %arg13: memref<4x8xf32, #tpu.memory_space<vmem>>, %arg14: memref<8x4xf32, #tpu.memory_space<vmem>>, %arg15: memref<4x8xf32, #tpu.memory_space<vmem>>, %arg16: memref<8x8xf32, #tpu.memory_space<vmem>>, %arg17: memref<8x8xf32, #tpu.memory_space<vmem>>, %arg18: memref<1x32xf32, #tpu.memory_space<vmem>>, %arg19: memref<16x32xf32, #tpu.memory_space<vmem>>) attributes {dimension_semantics = [#tpu.dimension_semantics<parallel>], iteration_bounds = array<i64: 1>, scalar_prefetch = 0 : i64, scratch_operands = 0 : i64, tpu.core_type = #tpu.core_type<tc>, window_params = [{transform_indices = @transform_0, window_bounds = array<i64: 16, 32>}, {pipeline_mode = #tpu.pipeline_mode<synchronous>, transform_indices = @transform_1, window_bounds = array<i64: 16, 4>}, {pipeline_mode = #tpu.pipeline_mode<synchronous>, transform_indices = @transform_2, window_bounds = array<i64: 4, 16>}, {pipeline_mode = #tpu.pipeline_mode<synchronous>, transform_indices = @transform_3, window_bounds = array<i64: 16, 4>}, {pipeline_mode = #tpu.pipeline_mode<synchronous>, transform_indices = @transform_4, window_bounds = array<i64: 4, 16>}, {pipeline_mode = #tpu.pipeline_mode<synchronous>, transform_indices = @transform_5, window_bounds = array<i64: 8, 4>}, {pipeline_mode = #tpu.pipeline_mode<synchronous>, transform_indices = @transform_6, window_bounds = array<i64: 4, 8>}, {pipeline_mode = #tpu.pipeline_mode<synchronous>, transform_indices = @transform_7, window_bounds = array<i64: 8, 4>}, {pipeline_mode = #tpu.pipeline_mode<synchronous>, transform_indices = @transform_8, window_bounds = array<i64: 4, 8>}, {pipeline_mode = #tpu.pipeline_mode<synchronous>, transform_indices = @transform_9, window_bounds = array<i64: 8, 8>}, {pipeline_mode = #tpu.pipeline_mode<synchronous>, transform_indices = @transform_10, window_bounds = array<i64: 8, 8>}, {pipeline_mode = #tpu.pipeline_mode<synchronous>, transform_indices = @transform_11, window_bounds = array<i64: 8, 4>}, {pipeline_mode = #tpu.pipeline_mode<synchronous>, transform_indices = @transform_12, window_bounds = array<i64: 4, 8>}, {pipeline_mode = #tpu.pipeline_mode<synchronous>, transform_indices = @transform_13, window_bounds = array<i64: 8, 4>}, {pipeline_mode = #tpu.pipeline_mode<synchronous>, transform_indices = @transform_14, window_bounds = array<i64: 4, 8>}, {pipeline_mode = #tpu.pipeline_mode<synchronous>, transform_indices = @transform_15, window_bounds = array<i64: 8, 8>}, {pipeline_mode = #tpu.pipeline_mode<synchronous>, transform_indices = @transform_16, window_bounds = array<i64: 8, 8>}, {pipeline_mode = #tpu.pipeline_mode<synchronous>, transform_indices = @transform_17, window_bounds = array<i64: 1, 32>}, {transform_indices = @transform_18, window_bounds = array<i64: 16, 32>}]} {
    %c0 = arith.constant 0 : index
    %c0_0 = arith.constant 0 : index
    %0 = vector.load %arg1[%c0, %c0_0] : memref<16x32xf32, #tpu.memory_space<vmem>>, vector<16x32xf32>
    %1 = vector.extract_strided_slice %0 {offsets = [0, 0], sizes = [16, 16], strides = [1, 1]} : vector<16x32xf32> to vector<16x16xf32>
    %2 = vector.extract_strided_slice %0 {offsets = [0, 16], sizes = [16, 16], strides = [1, 1]} : vector<16x32xf32> to vector<16x16xf32>
    %c0_1 = arith.constant 0 : index
    %c0_2 = arith.constant 0 : index
    %3 = vector.load %arg2[%c0_1, %c0_2] : memref<16x4xf32, #tpu.memory_space<vmem>>, vector<16x4xf32>
    %c0_3 = arith.constant 0 : index
    %c0_4 = arith.constant 0 : index
    %4 = vector.load %arg3[%c0_3, %c0_4] : memref<4x16xf32, #tpu.memory_space<vmem>>, vector<4x16xf32>
    %c0_5 = arith.constant 0 : index
    %c0_6 = arith.constant 0 : index
    %5 = vector.load %arg4[%c0_5, %c0_6] : memref<16x4xf32, #tpu.memory_space<vmem>>, vector<16x4xf32>
    %c0_7 = arith.constant 0 : index
    %c0_8 = arith.constant 0 : index
    %6 = vector.load %arg5[%c0_7, %c0_8] : memref<4x16xf32, #tpu.memory_space<vmem>>, vector<4x16xf32>
    %cst = arith.constant dense<0.000000e+00> : vector<16x4xf32>
    %7 = tpu.matmul %2, %5, %cst {dimension_numbers = #tpu.dot_dimension_numbers<[1], [0], [0], [1], [0, 0, 1, 1], [], []>} : vector<16x16xf32>, vector<16x4xf32>, vector<16x4xf32> -> vector<16x4xf32>
    %cst_9 = arith.constant dense<0.000000e+00> : vector<16x4xf32>
    %8 = tpu.matmul %1, %3, %cst_9 {dimension_numbers = #tpu.dot_dimension_numbers<[1], [0], [0], [1], [0, 0, 1, 1], [], []>} : vector<16x16xf32>, vector<16x4xf32>, vector<16x4xf32> -> vector<16x4xf32>
    %9 = vector.extract_strided_slice %1 {offsets = [0, 0], sizes = [16, 8], strides = [1, 1]} : vector<16x16xf32> to vector<16x8xf32>
    %10 = vector.extract_strided_slice %1 {offsets = [0, 8], sizes = [16, 8], strides = [1, 1]} : vector<16x16xf32> to vector<16x8xf32>
    %c0_10 = arith.constant 0 : index
    %c0_11 = arith.constant 0 : index
    %11 = vector.load %arg6[%c0_10, %c0_11] : memref<8x4xf32, #tpu.memory_space<vmem>>, vector<8x4xf32>
    %c0_12 = arith.constant 0 : index
    %c0_13 = arith.constant 0 : index
    %12 = vector.load %arg7[%c0_12, %c0_13] : memref<4x8xf32, #tpu.memory_space<vmem>>, vector<4x8xf32>
    %c0_14 = arith.constant 0 : index
    %c0_15 = arith.constant 0 : index
    %13 = vector.load %arg8[%c0_14, %c0_15] : memref<8x4xf32, #tpu.memory_space<vmem>>, vector<8x4xf32>
    %c0_16 = arith.constant 0 : index
    %c0_17 = arith.constant 0 : index
    %14 = vector.load %arg9[%c0_16, %c0_17] : memref<4x8xf32, #tpu.memory_space<vmem>>, vector<4x8xf32>
    %cst_18 = arith.constant dense<0.000000e+00> : vector<16x4xf32>
    %15 = tpu.matmul %10, %13, %cst_18 {dimension_numbers = #tpu.dot_dimension_numbers<[1], [0], [0], [1], [0, 0, 1, 1], [], []>} : vector<16x8xf32>, vector<8x4xf32>, vector<16x4xf32> -> vector<16x4xf32>
    %cst_19 = arith.constant dense<0.000000e+00> : vector<16x4xf32>
    %16 = tpu.matmul %9, %11, %cst_19 {dimension_numbers = #tpu.dot_dimension_numbers<[1], [0], [0], [1], [0, 0, 1, 1], [], []>} : vector<16x8xf32>, vector<8x4xf32>, vector<16x4xf32> -> vector<16x4xf32>
    %c0_20 = arith.constant 0 : index
    %c0_21 = arith.constant 0 : index
    %17 = vector.load %arg10[%c0_20, %c0_21] : memref<8x8xf32, #tpu.memory_space<vmem>>, vector<8x8xf32>
    %cst_22 = arith.constant dense<0.000000e+00> : vector<16x8xf32>
    %18 = tpu.matmul %9, %17, %cst_22 {dimension_numbers = #tpu.dot_dimension_numbers<[1], [0], [0], [1], [0, 0, 1, 1], [], []>} : vector<16x8xf32>, vector<8x8xf32>, vector<16x8xf32> -> vector<16x8xf32>
    %cst_23 = arith.constant dense<0.000000e+00> : vector<16x8xf32>
    %19 = tpu.matmul %15, %14, %cst_23 {dimension_numbers = #tpu.dot_dimension_numbers<[1], [0], [0], [1], [0, 0, 1, 1], [], []>} : vector<16x4xf32>, vector<4x8xf32>, vector<16x8xf32> -> vector<16x8xf32>
    %20 = arith.addf %18, %19 : vector<16x8xf32>
    %cst_24 = arith.constant dense<0.000000e+00> : vector<16x8xf32>
    %21 = tpu.matmul %16, %12, %cst_24 {dimension_numbers = #tpu.dot_dimension_numbers<[1], [0], [0], [1], [0, 0, 1, 1], [], []>} : vector<16x4xf32>, vector<4x8xf32>, vector<16x8xf32> -> vector<16x8xf32>
    %c0_25 = arith.constant 0 : index
    %c0_26 = arith.constant 0 : index
    %22 = vector.load %arg11[%c0_25, %c0_26] : memref<8x8xf32, #tpu.memory_space<vmem>>, vector<8x8xf32>
    %cst_27 = arith.constant dense<0.000000e+00> : vector<16x8xf32>
    %23 = tpu.matmul %10, %22, %cst_27 {dimension_numbers = #tpu.dot_dimension_numbers<[1], [0], [0], [1], [0, 0, 1, 1], [], []>} : vector<16x8xf32>, vector<8x8xf32>, vector<16x8xf32> -> vector<16x8xf32>
    %24 = arith.addf %21, %23 : vector<16x8xf32>
    %25 = tpu.concatenate %20, %24 in 1 : vector<16x8xf32>, vector<16x8xf32> -> vector<16x16xf32>
    %cst_28 = arith.constant dense<0.000000e+00> : vector<16x16xf32>
    %26 = tpu.matmul %7, %6, %cst_28 {dimension_numbers = #tpu.dot_dimension_numbers<[1], [0], [0], [1], [0, 0, 1, 1], [], []>} : vector<16x4xf32>, vector<4x16xf32>, vector<16x16xf32> -> vector<16x16xf32>
    %27 = arith.addf %25, %26 : vector<16x16xf32>
    %cst_29 = arith.constant dense<0.000000e+00> : vector<16x16xf32>
    %28 = tpu.matmul %8, %4, %cst_29 {dimension_numbers = #tpu.dot_dimension_numbers<[1], [0], [0], [1], [0, 0, 1, 1], [], []>} : vector<16x4xf32>, vector<4x16xf32>, vector<16x16xf32> -> vector<16x16xf32>
    %29 = vector.extract_strided_slice %2 {offsets = [0, 0], sizes = [16, 8], strides = [1, 1]} : vector<16x16xf32> to vector<16x8xf32>
    %30 = vector.extract_strided_slice %2 {offsets = [0, 8], sizes = [16, 8], strides = [1, 1]} : vector<16x16xf32> to vector<16x8xf32>
    %c0_30 = arith.constant 0 : index
    %c0_31 = arith.constant 0 : index
    %31 = vector.load %arg12[%c0_30, %c0_31] : memref<8x4xf32, #tpu.memory_space<vmem>>, vector<8x4xf32>
    %c0_32 = arith.constant 0 : index
    %c0_33 = arith.constant 0 : index
    %32 = vector.load %arg13[%c0_32, %c0_33] : memref<4x8xf32, #tpu.memory_space<vmem>>, vector<4x8xf32>
    %c0_34 = arith.constant 0 : index
    %c0_35 = arith.constant 0 : index
    %33 = vector.load %arg14[%c0_34, %c0_35] : memref<8x4xf32, #tpu.memory_space<vmem>>, vector<8x4xf32>
    %c0_36 = arith.constant 0 : index
    %c0_37 = arith.constant 0 : index
    %34 = vector.load %arg15[%c0_36, %c0_37] : memref<4x8xf32, #tpu.memory_space<vmem>>, vector<4x8xf32>
    %cst_38 = arith.constant dense<0.000000e+00> : vector<16x4xf32>
    %35 = tpu.matmul %30, %33, %cst_38 {dimension_numbers = #tpu.dot_dimension_numbers<[1], [0], [0], [1], [0, 0, 1, 1], [], []>} : vector<16x8xf32>, vector<8x4xf32>, vector<16x4xf32> -> vector<16x4xf32>
    %cst_39 = arith.constant dense<0.000000e+00> : vector<16x4xf32>
    %36 = tpu.matmul %29, %31, %cst_39 {dimension_numbers = #tpu.dot_dimension_numbers<[1], [0], [0], [1], [0, 0, 1, 1], [], []>} : vector<16x8xf32>, vector<8x4xf32>, vector<16x4xf32> -> vector<16x4xf32>
    %c0_40 = arith.constant 0 : index
    %c0_41 = arith.constant 0 : index
    %37 = vector.load %arg16[%c0_40, %c0_41] : memref<8x8xf32, #tpu.memory_space<vmem>>, vector<8x8xf32>
    %cst_42 = arith.constant dense<0.000000e+00> : vector<16x8xf32>
    %38 = tpu.matmul %29, %37, %cst_42 {dimension_numbers = #tpu.dot_dimension_numbers<[1], [0], [0], [1], [0, 0, 1, 1], [], []>} : vector<16x8xf32>, vector<8x8xf32>, vector<16x8xf32> -> vector<16x8xf32>
    %cst_43 = arith.constant dense<0.000000e+00> : vector<16x8xf32>
    %39 = tpu.matmul %35, %34, %cst_43 {dimension_numbers = #tpu.dot_dimension_numbers<[1], [0], [0], [1], [0, 0, 1, 1], [], []>} : vector<16x4xf32>, vector<4x8xf32>, vector<16x8xf32> -> vector<16x8xf32>
    %40 = arith.addf %38, %39 : vector<16x8xf32>
    %cst_44 = arith.constant dense<0.000000e+00> : vector<16x8xf32>
    %41 = tpu.matmul %36, %32, %cst_44 {dimension_numbers = #tpu.dot_dimension_numbers<[1], [0], [0], [1], [0, 0, 1, 1], [], []>} : vector<16x4xf32>, vector<4x8xf32>, vector<16x8xf32> -> vector<16x8xf32>
    %c0_45 = arith.constant 0 : index
    %c0_46 = arith.constant 0 : index
    %42 = vector.load %arg17[%c0_45, %c0_46] : memref<8x8xf32, #tpu.memory_space<vmem>>, vector<8x8xf32>
    %cst_47 = arith.constant dense<0.000000e+00> : vector<16x8xf32>
    %43 = tpu.matmul %30, %42, %cst_47 {dimension_numbers = #tpu.dot_dimension_numbers<[1], [0], [0], [1], [0, 0, 1, 1], [], []>} : vector<16x8xf32>, vector<8x8xf32>, vector<16x8xf32> -> vector<16x8xf32>
    %44 = arith.addf %41, %43 : vector<16x8xf32>
    %45 = tpu.concatenate %40, %44 in 1 : vector<16x8xf32>, vector<16x8xf32> -> vector<16x16xf32>
    %46 = arith.addf %28, %45 : vector<16x16xf32>
    %47 = tpu.concatenate %27, %46 in 1 : vector<16x16xf32>, vector<16x16xf32> -> vector<16x32xf32>
    %c0_48 = arith.constant 0 : index
    %c0_49 = arith.constant 0 : index
    %48 = vector.load %arg18[%c0_48, %c0_49] : memref<1x32xf32, #tpu.memory_space<vmem>>, vector<1x32xf32>
    %49 = vector.broadcast %48 : vector<1x32xf32> to vector<16x32xf32>
    %50 = arith.addf %47, %49 : vector<16x32xf32>
    %c0_50 = arith.constant 0 : index
    %c0_51 = arith.constant 0 : index
    %51 = vector.load %arg19[%c0_50, %c0_51] : memref<16x32xf32, #tpu.memory_space<vmem>>, vector<16x32xf32>
    tpu.vector_store %arg19[%c0_50, %c0_51], %50 {strides = array<i32>} : memref<16x32xf32, #tpu.memory_space<vmem>>, vector<16x32xf32>,
    return
  }
  func.func @transform_0(%arg0: i32) -> (i32, i32) {
    %c0_i32 = arith.constant 0 : i32
    %c0_i32_0 = arith.constant 0 : i32
    return %arg0, %c0_i32 : i32, i32
  }
  func.func @transform_1(%arg0: i32) -> (i32, i32) {
    %c0_i32 = arith.constant 0 : i32
    %c0_i32_0 = arith.constant 0 : i32
    %c0_i32_1 = arith.constant 0 : i32
    return %c0_i32, %c0_i32_0 : i32, i32
  }
  func.func @transform_2(%arg0: i32) -> (i32, i32) {
    %c0_i32 = arith.constant 0 : i32
    %c0_i32_0 = arith.constant 0 : i32
    %c0_i32_1 = arith.constant 0 : i32
    return %c0_i32, %c0_i32_0 : i32, i32
  }
  func.func @transform_3(%arg0: i32) -> (i32, i32) {
    %c0_i32 = arith.constant 0 : i32
    %c0_i32_0 = arith.constant 0 : i32
    %c0_i32_1 = arith.constant 0 : i32
    return %c0_i32, %c0_i32_0 : i32, i32
  }
  func.func @transform_4(%arg0: i32) -> (i32, i32) {
    %c0_i32 = arith.constant 0 : i32
    %c0_i32_0 = arith.constant 0 : i32
    %c0_i32_1 = arith.constant 0 : i32
    return %c0_i32, %c0_i32_0 : i32, i32
  }
  func.func @transform_5(%arg0: i32) -> (i32, i32) {
    %c0_i32 = arith.constant 0 : i32
    %c0_i32_0 = arith.constant 0 : i32
    %c0_i32_1 = arith.constant 0 : i32
    return %c0_i32, %c0_i32_0 : i32, i32
  }
  func.func @transform_6(%arg0: i32) -> (i32, i32) {
    %c0_i32 = arith.constant 0 : i32
    %c0_i32_0 = arith.constant 0 : i32
    %c0_i32_1 = arith.constant 0 : i32
    return %c0_i32, %c0_i32_0 : i32, i32
  }
  func.func @transform_7(%arg0: i32) -> (i32, i32) {
    %c0_i32 = arith.constant 0 : i32
    %c0_i32_0 = arith.constant 0 : i32
    %c0_i32_1 = arith.constant 0 : i32
    return %c0_i32, %c0_i32_0 : i32, i32
  }
  func.func @transform_8(%arg0: i32) -> (i32, i32) {
    %c0_i32 = arith.constant 0 : i32
    %c0_i32_0 = arith.constant 0 : i32
    %c0_i32_1 = arith.constant 0 : i32
    return %c0_i32, %c0_i32_0 : i32, i32
  }
  func.func @transform_9(%arg0: i32) -> (i32, i32) {
    %c0_i32 = arith.constant 0 : i32
    %c0_i32_0 = arith.constant 0 : i32
    %c0_i32_1 = arith.constant 0 : i32
    return %c0_i32, %c0_i32_0 : i32, i32
  }
  func.func @transform_10(%arg0: i32) -> (i32, i32) {
    %c0_i32 = arith.constant 0 : i32
    %c0_i32_0 = arith.constant 0 : i32
    %c0_i32_1 = arith.constant 0 : i32
    return %c0_i32, %c0_i32_0 : i32, i32
  }
  func.func @transform_11(%arg0: i32) -> (i32, i32) {
    %c0_i32 = arith.constant 0 : i32
    %c0_i32_0 = arith.constant 0 : i32
    %c0_i32_1 = arith.constant 0 : i32
    return %c0_i32, %c0_i32_0 : i32, i32
  }
  func.func @transform_12(%arg0: i32) -> (i32, i32) {
    %c0_i32 = arith.constant 0 : i32
    %c0_i32_0 = arith.constant 0 : i32
    %c0_i32_1 = arith.constant 0 : i32
    return %c0_i32, %c0_i32_0 : i32, i32
  }
  func.func @transform_13(%arg0: i32) -> (i32, i32) {
    %c0_i32 = arith.constant 0 : i32
    %c0_i32_0 = arith.constant 0 : i32
    %c0_i32_1 = arith.constant 0 : i32
    return %c0_i32, %c0_i32_0 : i32, i32
  }
  func.func @transform_14(%arg0: i32) -> (i32, i32) {
    %c0_i32 = arith.constant 0 : i32
    %c0_i32_0 = arith.constant 0 : i32
    %c0_i32_1 = arith.constant 0 : i32
    return %c0_i32, %c0_i32_0 : i32, i32
  }
  func.func @transform_15(%arg0: i32) -> (i32, i32) {
    %c0_i32 = arith.constant 0 : i32
    %c0_i32_0 = arith.constant 0 : i32
    %c0_i32_1 = arith.constant 0 : i32
    return %c0_i32, %c0_i32_0 : i32, i32
  }
  func.func @transform_16(%arg0: i32) -> (i32, i32) {
    %c0_i32 = arith.constant 0 : i32
    %c0_i32_0 = arith.constant 0 : i32
    %c0_i32_1 = arith.constant 0 : i32
    return %c0_i32, %c0_i32_0 : i32, i32
  }
  func.func @transform_17(%arg0: i32) -> (i32, i32) {
    %c0_i32 = arith.constant 0 : i32
    %c0_i32_0 = arith.constant 0 : i32
    %c0_i32_1 = arith.constant 0 : i32
    return %c0_i32, %c0_i32_0 : i32, i32
  }
  func.func @transform_18(%arg0: i32) -> (i32, i32) {
    %c0_i32 = arith.constant 0 : i32
    %c0_i32_0 = arith.constant 0 : i32
    return %arg0, %c0_i32 : i32, i32
  }
}

</mosaic_0001>

<llo_original>
// kernel: _lambda_.1
$region0: #{_lambda_.1}
  #allocation0 [shape = 'u32[]', space=smem, size = 0x4, offset = 0x4, fixed_abs, tag = 'smem constant byte address 0x4 - core index']
  #allocation1 [shape = 'u32[72,128]{1,0:T(1,128)}', space=vmem, size = 0x9000, scoped, tag = 'internal scratch']
  %s0 = inlined_call_operand.hbm [shape: f32[16,32], index: 0, kind: input, shape index: {}]
  %s1 = inlined_call_operand.hbm [shape: f32[16,4], index: 1, kind: input, shape index: {}]
  %s2 = inlined_call_operand.hbm [shape: f32[4,16], index: 2, kind: input, shape index: {}]
  %s3 = inlined_call_operand.hbm [shape: f32[16,4], index: 3, kind: input, shape index: {}]
  %s4 = inlined_call_operand.hbm [shape: f32[4,16], index: 4, kind: input, shape index: {}]
  %s5 = inlined_call_operand.hbm [shape: f32[8,4], index: 5, kind: input, shape index: {}]
  %s6 = inlined_call_operand.hbm [shape: f32[4,8], index: 6, kind: input, shape index: {}]
  %s7 = inlined_call_operand.hbm [shape: f32[8,4], index: 7, kind: input, shape index: {}]
  %s8 = inlined_call_operand.hbm [shape: f32[4,8], index: 8, kind: input, shape index: {}]
  %s9 = inlined_call_operand.hbm [shape: f32[8,8], index: 9, kind: input, shape index: {}]
  %s10 = inlined_call_operand.hbm [shape: f32[8,8], index: 10, kind: input, shape index: {}]
  %s11 = inlined_call_operand.hbm [shape: f32[8,4], index: 11, kind: input, shape index: {}]
  %s12 = inlined_call_operand.hbm [shape: f32[4,8], index: 12, kind: input, shape index: {}]
  %s13 = inlined_call_operand.hbm [shape: f32[8,4], index: 13, kind: input, shape index: {}]
  %s14 = inlined_call_operand.hbm [shape: f32[4,8], index: 14, kind: input, shape index: {}]
  %s15 = inlined_call_operand.vmem [shape: f32[8,8], index: 15, kind: input, shape index: {}]
  %s16 = inlined_call_operand.vmem [shape: f32[8,8], index: 16, kind: input, shape index: {}]
  %s17 = inlined_call_operand.vmem [shape: f32[1,32], index: 17, kind: input, shape index: {}]
  %s18 = inlined_call_operand.hbm [shape: f32[16,32], index: 18, kind: output, shape index: {}]
  %s19 = sld [smem:[#allocation0]]
  $region142: #{_lambda_.1} parent=0
    _
  %s21 = ssub.s32 1, %s19
  %s22 = scalar_select 0, %s21, %s19
  $region1: #{_lambda_.1} parent=0
    #allocation2 [shape = 'u8[8192]{0}', space=vmem, size = 0x2000, scoped, tag = 'input window, operand 0, single buffered']
    #allocation3 [shape = 's32[1]{0}', space=sflag, size = 0x4, scoped, tag = 'scoped memory for _lambda_.1']
    #allocation4 [shape = 's32[1]{0}', space=sflag, size = 0x4, scoped, tag = 'scoped memory for _lambda_.1']
    #allocation5 [shape = 'u8[8192]{0}', space=vmem, size = 0x2000, scoped, tag = 'input window, operand 1, single buffered']
    #allocation6 [shape = 's32[1]{0}', space=sflag, size = 0x4, scoped, tag = 'scoped memory for _lambda_.1']
    #allocation7 [shape = 'u8[2048]{0}', space=vmem, size = 0x800, scoped, tag = 'input window, operand 2, single buffered']
    #allocation8 [shape = 'u8[8192]{0}', space=vmem, size = 0x2000, scoped, tag = 'input window, operand 3, single buffered']
    #allocation9 [shape = 's32[1]{0}', space=sflag, size = 0x4, scoped, tag = 'scoped memory for _lambda_.1']
    #allocation10 [shape = 'u8[2048]{0}', space=vmem, size = 0x800, scoped, tag = 'input window, operand 4, single buffered']
    #allocation11 [shape = 'u8[4096]{0}', space=vmem, size = 0x1000, scoped, tag = 'input window, operand 5, single buffered']
    #allocation12 [shape = 's32[1]{0}', space=sflag, size = 0x4, scoped, tag = 'scoped memory for _lambda_.1']
    #allocation13 [shape = 'u8[2048]{0}', space=vmem, size = 0x800, scoped, tag = 'input window, operand 6, single buffered']
    #allocation14 [shape = 'u8[4096]{0}', space=vmem, size = 0x1000, scoped, tag = 'input window, operand 7, single buffered']
    #allocation15 [shape = 's32[1]{0}', space=sflag, size = 0x4, scoped, tag = 'scoped memory for _lambda_.1']
    #allocation16 [shape = 'u8[2048]{0}', space=vmem, size = 0x800, scoped, tag = 'input window, operand 8, single buffered']
    #allocation17 [shape = 'u8[4096]{0}', space=vmem, size = 0x1000, scoped, tag = 'input window, operand 9, single buffered']
    #allocation18 [shape = 's32[1]{0}', space=sflag, size = 0x4, scoped, tag = 'scoped memory for _lambda_.1']
    #allocation19 [shape = 'u8[4096]{0}', space=vmem, size = 0x1000, scoped, tag = 'input window, operand 10, single buffered']
    #allocation20 [shape = 'u8[4096]{0}', space=vmem, size = 0x1000, scoped, tag = 'input window, operand 11, single buffered']
    #allocation21 [shape = 's32[1]{0}', space=sflag, size = 0x4, scoped, tag = 'scoped memory for _lambda_.1']
    #allocation22 [shape = 'u8[2048]{0}', space=vmem, size = 0x800, scoped, tag = 'input window, operand 12, single buffered']
    #allocation23 [shape = 'u8[4096]{0}', space=vmem, size = 0x1000, scoped, tag = 'input window, operand 13, single buffered']
    #allocation24 [shape = 's32[1]{0}', space=sflag, size = 0x4, scoped, tag = 'scoped memory for _lambda_.1']
    #allocation25 [shape = 'u8[2048]{0}', space=vmem, size = 0x800, scoped, tag = 'input window, operand 14, single buffered']
    #allocation26 [shape = 'u8[8192]{0}', space=vmem, size = 0x2000, scoped, tag = 'output window, operand 0, single buffered']
    %23 = vsyncpa [#allocation3], 0
    %24 = vsyncpa [#allocation6], 0
    %25 = vsyncpa [#allocation9], 0
    %26 = vsyncpa [#allocation12], 0
    %27 = vsyncpa [#allocation15], 0
    %28 = vsyncpa [#allocation18], 0
    %29 = vsyncpa [#allocation21], 0
    %30 = vsyncpa [#allocation24], 0
    %31 = vsyncpa [#allocation4], 0
    // Predicated region
    $region2: #{_lambda_.1} parent=1 // pred_check
      _
    $region3: #{_lambda_.1} parent=1 // pred_check_branch
      %33 = sbr.rel (0) target = $region5
    $region4: #{_lambda_.1} parent=1 // pred_region
      %35 = vsyncadd [#allocation3], 0
      %s36 = sshll.u32 %s0, 4
      %s37 = int_to_ptr.hbm [resolvable:$true] %s36
      %s38 = sshll.u32 [#allocation2], 4
      %s39 = int_to_ptr.vmem [resolvable:$true] %s38
      %44 = dma.hbm_to_vmem [thread:$0]  %s37, 256, %s39, [#allocation3], 128, 128, 8
    $region5: #{_lambda_.1} parent=1 // pred_fallthru
      _
    // Predicated region
    $region6: #{_lambda_.1} parent=1 // pred_check
      _
    $region7: #{_lambda_.1} parent=1 // pred_check_branch
      %46 = sbr.rel (0) target = $region9
    $region8: #{_lambda_.1} parent=1 // pred_region
      %48 = vsyncadd [#allocation6], 0
      %s49 = sshll.u32 %s1, 4
      %s50 = int_to_ptr.hbm [resolvable:$true] %s49
      %s51 = sshll.u32 [#allocation5], 4
      %s52 = int_to_ptr.vmem [resolvable:$true] %s51
      %57 = dma.hbm_to_vmem [thread:$0]  %s50, 256, %s52, [#allocation6], 128, 128, 8
    $region9: #{_lambda_.1} parent=1 // pred_fallthru
      _
    // Predicated region
    $region10: #{_lambda_.1} parent=1 // pred_check
      _
    $region11: #{_lambda_.1} parent=1 // pred_check_branch
      %59 = sbr.rel (0) target = $region13
    $region12: #{_lambda_.1} parent=1 // pred_region
      %61 = vsyncadd [#allocation6], 0
      %s63 = sshll.u32 %s2, 4
      %s64 = int_to_ptr.hbm [resolvable:$true] %s63
      %s65 = sshll.u32 [#allocation7], 4
      %s66 = int_to_ptr.vmem [resolvable:$true] %s65
      %68 = dma.hbm_to_vmem [thread:$0]  %s64, 64, %s66, [#allocation6]
    $region13: #{_lambda_.1} parent=1 // pred_fallthru
      _
    // Predicated region
    $region14: #{_lambda_.1} parent=1 // pred_check
      _
    $region15: #{_lambda_.1} parent=1 // pred_check_branch
      %70 = sbr.rel (0) target = $region17
    $region16: #{_lambda_.1} parent=1 // pred_region
      %72 = vsyncadd [#allocation9], 0
      %s73 = sshll.u32 %s3, 4
      %s74 = int_to_ptr.hbm [resolvable:$true] %s73
      %s75 = sshll.u32 [#allocation8], 4
      %s76 = int_to_ptr.vmem [resolvable:$true] %s75
      %81 = dma.hbm_to_vmem [thread:$0]  %s74, 256, %s76, [#allocation9], 128, 128, 8
    $region17: #{_lambda_.1} parent=1 // pred_fallthru
      _
    // Predicated region
    $region18: #{_lambda_.1} parent=1 // pred_check
      _
    $region19: #{_lambda_.1} parent=1 // pred_check_branch
      %83 = sbr.rel (0) target = $region21
    $region20: #{_lambda_.1} parent=1 // pred_region
      %85 = vsyncadd [#allocation9], 0
      %s87 = sshll.u32 %s4, 4
      %s88 = int_to_ptr.hbm [resolvable:$true] %s87
      %s89 = sshll.u32 [#allocation10], 4
      %s90 = int_to_ptr.vmem [resolvable:$true] %s89
      %92 = dma.hbm_to_vmem [thread:$0]  %s88, 64, %s90, [#allocation9]
    $region21: #{_lambda_.1} parent=1 // pred_fallthru
      _
    // Predicated region
    $region22: #{_lambda_.1} parent=1 // pred_check
      _
    $region23: #{_lambda_.1} parent=1 // pred_check_branch
      %94 = sbr.rel (0) target = $region25
    $region24: #{_lambda_.1} parent=1 // pred_region
      %96 = vsyncadd [#allocation12], 0
      %s98 = sshll.u32 %s5, 4
      %s99 = int_to_ptr.hbm [resolvable:$true] %s98
      %s100 = sshll.u32 [#allocation11], 4
      %s101 = int_to_ptr.vmem [resolvable:$true] %s100
      %103 = dma.hbm_to_vmem [thread:$0]  %s99, 128, %s101, [#allocation12]
    $region25: #{_lambda_.1} parent=1 // pred_fallthru
      _
    // Predicated region
    $region26: #{_lambda_.1} parent=1 // pred_check
      _
    $region27: #{_lambda_.1} parent=1 // pred_check_branch
      %105 = sbr.rel (0) target = $region29
    $region28: #{_lambda_.1} parent=1 // pred_region
      %107 = vsyncadd [#allocation12], 0
      %s109 = sshll.u32 %s6, 4
      %s110 = int_to_ptr.hbm [resolvable:$true] %s109
      %s111 = sshll.u32 [#allocation13], 4
      %s112 = int_to_ptr.vmem [resolvable:$true] %s111
      %114 = dma.hbm_to_vmem [thread:$0]  %s110, 64, %s112, [#allocation12]
    $region29: #{_lambda_.1} parent=1 // pred_fallthru
      _
    // Predicated region
    $region30: #{_lambda_.1} parent=1 // pred_check
      _
    $region31: #{_lambda_.1} parent=1 // pred_check_branch
      %116 = sbr.rel (0) target = $region33
    $region32: #{_lambda_.1} parent=1 // pred_region
      %118 = vsyncadd [#allocation15], 0
      %s120 = sshll.u32 %s7, 4
      %s121 = int_to_ptr.hbm [resolvable:$true] %s120
      %s122 = sshll.u32 [#allocation14], 4
      %s123 = int_to_ptr.vmem [resolvable:$true] %s122
      %125 = dma.hbm_to_vmem [thread:$0]  %s121, 128, %s123, [#allocation15]
    $region33: #{_lambda_.1} parent=1 // pred_fallthru
      _
    // Predicated region
    $region34: #{_lambda_.1} parent=1 // pred_check
      _
    $region35: #{_lambda_.1} parent=1 // pred_check_branch
      %127 = sbr.rel (0) target = $region37
    $region36: #{_lambda_.1} parent=1 // pred_region
      %129 = vsyncadd [#allocation15], 0
      %s131 = sshll.u32 %s8, 4
      %s132 = int_to_ptr.hbm [resolvable:$true] %s131
      %s133 = sshll.u32 [#allocation16], 4
      %s134 = int_to_ptr.vmem [resolvable:$true] %s133
      %136 = dma.hbm_to_vmem [thread:$0]  %s132, 64, %s134, [#allocation15]
    $region37: #{_lambda_.1} parent=1 // pred_fallthru
      _
    // Predicated region
    $region38: #{_lambda_.1} parent=1 // pred_check
      _
    $region39: #{_lambda_.1} parent=1 // pred_check_branch
      %138 = sbr.rel (0) target = $region41
    $region40: #{_lambda_.1} parent=1 // pred_region
      %140 = vsyncadd [#allocation18], 0
      %s142 = sshll.u32 %s9, 4
      %s143 = int_to_ptr.hbm [resolvable:$true] %s142
      %s144 = sshll.u32 [#allocation17], 4
      %s145 = int_to_ptr.vmem [resolvable:$true] %s144
      %147 = dma.hbm_to_vmem [thread:$0]  %s143, 128, %s145, [#allocation18]
    $region41: #{_lambda_.1} parent=1 // pred_fallthru
      _
    // Predicated region
    $region42: #{_lambda_.1} parent=1 // pred_check
      _
    $region43: #{_lambda_.1} parent=1 // pred_check_branch
      %149 = sbr.rel (0) target = $region45
    $region44: #{_lambda_.1} parent=1 // pred_region
      %151 = vsyncadd [#allocation18], 0
      %s153 = sshll.u32 %s10, 4
      %s154 = int_to_ptr.hbm [resolvable:$true] %s153
      %s155 = sshll.u32 [#allocation19], 4
      %s156 = int_to_ptr.vmem [resolvable:$true] %s155
      %158 = dma.hbm_to_vmem [thread:$0]  %s154, 128, %s156, [#allocation18]
    $region45: #{_lambda_.1} parent=1 // pred_fallthru
      _
    // Predicated region
    $region46: #{_lambda_.1} parent=1 // pred_check
      _
    $region47: #{_lambda_.1} parent=1 // pred_check_branch
      %160 = sbr.rel (0) target = $region49
    $region48: #{_lambda_.1} parent=1 // pred_region
      %162 = vsyncadd [#allocation21], 0
      %s164 = sshll.u32 %s11, 4
      %s165 = int_to_ptr.hbm [resolvable:$true] %s164
      %s166 = sshll.u32 [#allocation20], 4
      %s167 = int_to_ptr.vmem [resolvable:$true] %s166
      %169 = dma.hbm_to_vmem [thread:$0]  %s165, 128, %s167, [#allocation21]
    $region49: #{_lambda_.1} parent=1 // pred_fallthru
      _
    // Predicated region
    $region50: #{_lambda_.1} parent=1 // pred_check
      _
    $region51: #{_lambda_.1} parent=1 // pred_check_branch
      %171 = sbr.rel (0) target = $region53
    $region52: #{_lambda_.1} parent=1 // pred_region
      %173 = vsyncadd [#allocation21], 0
      %s175 = sshll.u32 %s12, 4
      %s176 = int_to_ptr.hbm [resolvable:$true] %s175
      %s177 = sshll.u32 [#allocation22], 4
      %s178 = int_to_ptr.vmem [resolvable:$true] %s177
      %180 = dma.hbm_to_vmem [thread:$0]  %s176, 64, %s178, [#allocation21]
    $region53: #{_lambda_.1} parent=1 // pred_fallthru
      _
    // Predicated region
    $region54: #{_lambda_.1} parent=1 // pred_check
      _
    $region55: #{_lambda_.1} parent=1 // pred_check_branch
      %182 = sbr.rel (0) target = $region57
    $region56: #{_lambda_.1} parent=1 // pred_region
      %184 = vsyncadd [#allocation24], 0
      %s186 = sshll.u32 %s13, 4
      %s187 = int_to_ptr.hbm [resolvable:$true] %s186
      %s188 = sshll.u32 [#allocation23], 4
      %s189 = int_to_ptr.vmem [resolvable:$true] %s188
      %191 = dma.hbm_to_vmem [thread:$0]  %s187, 128, %s189, [#allocation24]
    $region57: #{_lambda_.1} parent=1 // pred_fallthru
      _
    // Predicated region
    $region58: #{_lambda_.1} parent=1 // pred_check
      _
    $region59: #{_lambda_.1} parent=1 // pred_check_branch
      %193 = sbr.rel (0) target = $region61
    $region60: #{_lambda_.1} parent=1 // pred_region
      %195 = vsyncadd [#allocation24], 0
      %s197 = sshll.u32 %s14, 4
      %s198 = int_to_ptr.hbm [resolvable:$true] %s197
      %s199 = sshll.u32 [#allocation25], 4
      %s200 = int_to_ptr.vmem [resolvable:$true] %s199
      %202 = dma.hbm_to_vmem [thread:$0]  %s198, 64, %s200, [#allocation24]
    $region61: #{_lambda_.1} parent=1 // pred_fallthru
      _
    // Predicated region
    $region62: #{_lambda_.1} parent=1 // pred_check
      _
    $region63: #{_lambda_.1} parent=1 // pred_check_branch
      %204 = sbr.rel (0) target = $region65
    $region64: #{_lambda_.1} parent=1 // pred_region
      _
    $region65: #{_lambda_.1} parent=1 // pred_fallthru
      _
    // Predicated region
    $region66: #{_lambda_.1} parent=1 // pred_check
      _
    $region67: #{_lambda_.1} parent=1 // pred_check_branch
      %206 = sbr.rel (0) target = $region69
    $region68: #{_lambda_.1} parent=1 // pred_region
      _
    $region69: #{_lambda_.1} parent=1 // pred_fallthru
      _
    // Predicated region
    $region70: #{_lambda_.1} parent=1 // pred_check
      _
    $region71: #{_lambda_.1} parent=1 // pred_check_branch
      %208 = sbr.rel (0) target = $region73
    $region72: #{_lambda_.1} parent=1 // pred_region
      _
    $region73: #{_lambda_.1} parent=1 // pred_fallthru
      _
    // Predicated region
    $region74: #{_lambda_.1} parent=1 // pred_check
      _
    $region75: #{_lambda_.1} parent=1 // pred_check_branch
      %210 = sbr.rel (0) target = $region77
    $region76: #{_lambda_.1} parent=1 // pred_region
      %212 = dma.done [#allocation3], 256
    $region77: #{_lambda_.1} parent=1 // pred_fallthru
      _
    // Predicated region
    $region78: #{_lambda_.1} parent=1 // pred_check
      _
    $region79: #{_lambda_.1} parent=1 // pred_check_branch
      %214 = sbr.rel (0) target = $region81
    $region80: #{_lambda_.1} parent=1 // pred_region
      %216 = dma.done [#allocation6], 256
    $region81: #{_lambda_.1} parent=1 // pred_fallthru
      _
    // Predicated region
    $region82: #{_lambda_.1} parent=1 // pred_check
      _
    $region83: #{_lambda_.1} parent=1 // pred_check_branch
      %218 = sbr.rel (0) target = $region85
    $region84: #{_lambda_.1} parent=1 // pred_region
      %220 = dma.done [#allocation6], 64
    $region85: #{_lambda_.1} parent=1 // pred_fallthru
      _
    // Predicated region
    $region86: #{_lambda_.1} parent=1 // pred_check
      _
    $region87: #{_lambda_.1} parent=1 // pred_check_branch
      %222 = sbr.rel (0) target = $region89
    $region88: #{_lambda_.1} parent=1 // pred_region
      %224 = dma.done [#allocation9], 256
    $region89: #{_lambda_.1} parent=1 // pred_fallthru
      _
    // Predicated region
    $region90: #{_lambda_.1} parent=1 // pred_check
      _
    $region91: #{_lambda_.1} parent=1 // pred_check_branch
      %226 = sbr.rel (0) target = $region93
    $region92: #{_lambda_.1} parent=1 // pred_region
      %228 = dma.done [#allocation9], 64
    $region93: #{_lambda_.1} parent=1 // pred_fallthru
      _
    // Predicated region
    $region94: #{_lambda_.1} parent=1 // pred_check
      _
    $region95: #{_lambda_.1} parent=1 // pred_check_branch
      %230 = sbr.rel (0) target = $region97
    $region96: #{_lambda_.1} parent=1 // pred_region
      %232 = dma.done [#allocation12], 128
    $region97: #{_lambda_.1} parent=1 // pred_fallthru
      _
    // Predicated region
    $region98: #{_lambda_.1} parent=1 // pred_check
      _
    $region99: #{_lambda_.1} parent=1 // pred_check_branch
      %234 = sbr.rel (0) target = $region101
    $region100: #{_lambda_.1} parent=1 // pred_region
      %236 = dma.done [#allocation12], 64
    $region101: #{_lambda_.1} parent=1 // pred_fallthru
      _
    // Predicated region
    $region102: #{_lambda_.1} parent=1 // pred_check
      _
    $region103: #{_lambda_.1} parent=1 // pred_check_branch
      %238 = sbr.rel (0) target = $region105
    $region104: #{_lambda_.1} parent=1 // pred_region
      %240 = dma.done [#allocation15], 128
    $region105: #{_lambda_.1} parent=1 // pred_fallthru
      _
    // Predicated region
    $region106: #{_lambda_.1} parent=1 // pred_check
      _
    $region107: #{_lambda_.1} parent=1 // pred_check_branch
      %242 = sbr.rel (0) target = $region109
    $region108: #{_lambda_.1} parent=1 // pred_region
      %244 = dma.done [#allocation15], 64
    $region109: #{_lambda_.1} parent=1 // pred_fallthru
      _
    // Predicated region
    $region110: #{_lambda_.1} parent=1 // pred_check
      _
    $region111: #{_lambda_.1} parent=1 // pred_check_branch
      %246 = sbr.rel (0) target = $region113
    $region112: #{_lambda_.1} parent=1 // pred_region
      %248 = dma.done [#allocation18], 128
    $region113: #{_lambda_.1} parent=1 // pred_fallthru
      _
    // Predicated region
    $region114: #{_lambda_.1} parent=1 // pred_check
      _
    $region115: #{_lambda_.1} parent=1 // pred_check_branch
      %250 = sbr.rel (0) target = $region117
    $region116: #{_lambda_.1} parent=1 // pred_region
      %252 = dma.done [#allocation18], 128
    $region117: #{_lambda_.1} parent=1 // pred_fallthru
      _
    // Predicated region
    $region118: #{_lambda_.1} parent=1 // pred_check
      _
    $region119: #{_lambda_.1} parent=1 // pred_check_branch
      %254 = sbr.rel (0) target = $region121
    $region120: #{_lambda_.1} parent=1 // pred_region
      %256 = dma.done [#allocation21], 128
    $region121: #{_lambda_.1} parent=1 // pred_fallthru
      _
    // Predicated region
    $region122: #{_lambda_.1} parent=1 // pred_check
      _
    $region123: #{_lambda_.1} parent=1 // pred_check_branch
      %258 = sbr.rel (0) target = $region125
    $region124: #{_lambda_.1} parent=1 // pred_region
      %260 = dma.done [#allocation21], 64
    $region125: #{_lambda_.1} parent=1 // pred_fallthru
      _
    // Predicated region
    $region126: #{_lambda_.1} parent=1 // pred_check
      _
    $region127: #{_lambda_.1} parent=1 // pred_check_branch
      %262 = sbr.rel (0) target = $region129
    $region128: #{_lambda_.1} parent=1 // pred_region
      %264 = dma.done [#allocation24], 128
    $region129: #{_lambda_.1} parent=1 // pred_fallthru
      _
    // Predicated region
    $region130: #{_lambda_.1} parent=1 // pred_check
      _
    $region131: #{_lambda_.1} parent=1 // pred_check_branch
      %266 = sbr.rel (0) target = $region133
    $region132: #{_lambda_.1} parent=1 // pred_region
      %268 = dma.done [#allocation24], 64
    $region133: #{_lambda_.1} parent=1 // pred_fallthru
      _
    %v269 = vld [vmem:[#allocation2] sm:$0xff]
    %v270 = vld [vmem:[#allocation2 + $0x8] sm:$0xff]
    %v271 = vld [vmem:[#allocation5] sm:$0xff]
    %v272 = vld [vmem:[#allocation5 + $0x8] sm:$0xff]
    %v273 = vld [vmem:[#allocation7] sm:$0xf]
    %v274 = vld [vmem:[#allocation8] sm:$0xff]
    %v275 = vld [vmem:[#allocation8 + $0x8] sm:$0xff]
    %v276 = vld [vmem:[#allocation10] sm:$0xf]
    %279 = vrot.lane.b32.xlu0 %v269, 112
    %v280 = vpop.permute.xlu0 %279
    %281 = vrot.lane.b32.xlu0 %v270, 112
    %v282 = vpop.permute.xlu0 %281
    %vm283 = vcmask 130048
    %v284 = vsel %vm283, %v280, 0
    %v286 = vsel %vm283, %v282, 0
    %288 = vmatpush.msra.mxu0 0.0
    %289 = vmatpush.msra.mxu0 0.0
    %290 = vmatpush.msra.mxu0 0.0
    %291 = vmatpush.msra.mxu0 0.0
    %292 = vmatpush.msra.mxu0 0.0
    %293 = vmatpush.msra.mxu0 0.0
    %294 = vmatpush.msra.mxu0 0.0
    %295 = vmatpush.msra.mxu0 0.0
    %296 = vmatpush.msra.mxu0 0.0
    %297 = vmatpush.msra.mxu0 0.0
    %298 = vmatpush.msra.mxu0 0.0
    %299 = vmatpush.msra.mxu0 0.0
    %300 = vmatpush.msra.mxu0 0.0
    %301 = vmatpush.msra.mxu0 0.0
    %302 = vmatpush.msra.mxu0 %v275
    %303 = vmatpush.msra.mxu0 %v274
    %304 = vmatmul.f32.gmra.mxu0 %v284
    %v305 = vpop.f32.mrf.mxu0
    %v306 = vadd.f32 0.0, %v305
    %307 = vmatmul.f32.gmra.mxu0 %v286
    %v308 = vpop.f32.mrf.mxu0
    %v309 = vadd.f32 0.0, %v308
    %310 = vdwg.mxu0
    %v311 = vsel %vm283, %v269, 0
    %v313 = vsel %vm283, %v270, 0
    %315 = vmatpush.msra.mxu0 0.0
    %316 = vmatpush.msra.mxu0 0.0
    %317 = vmatpush.msra.mxu0 0.0
    %318 = vmatpush.msra.mxu0 0.0
    %319 = vmatpush.msra.mxu0 0.0
    %320 = vmatpush.msra.mxu0 0.0
    %321 = vmatpush.msra.mxu0 0.0
    %322 = vmatpush.msra.mxu0 0.0
    %323 = vmatpush.msra.mxu0 0.0
    %324 = vmatpush.msra.mxu0 0.0
    %325 = vmatpush.msra.mxu0 0.0
    %326 = vmatpush.msra.mxu0 0.0
    %327 = vmatpush.msra.mxu0 0.0
    %328 = vmatpush.msra.mxu0 0.0
    %329 = vmatpush.msra.mxu0 %v272
    %330 = vmatpush.msra.mxu0 %v271
    %331 = vmatmul.f32.gmra.mxu0 %v311
    %v332 = vpop.f32.mrf.mxu0
    %v333 = vadd.f32 0.0, %v332
    %334 = vmatmul.f32.gmra.mxu0 %v313
    %v335 = vpop.f32.mrf.mxu0
    %v336 = vadd.f32 0.0, %v335
    %337 = vdwg.mxu0
    %v338 = vld [vmem:[#allocation11] sm:$0xff]
    %v339 = vld [vmem:[#allocation13] sm:$0xf]
    %v340 = vld [vmem:[#allocation14] sm:$0xff]
    %v341 = vld [vmem:[#allocation16] sm:$0xf]
    %342 = vrot.lane.b32.xlu0 %v269, 120
    %v343 = vpop.permute.xlu0 %342
    %344 = vrot.lane.b32.xlu0 %v270, 120
    %v345 = vpop.permute.xlu0 %344
    %vm346 = vcmask 64512
    %v347 = vsel %vm346, %v343, 0
    %v349 = vsel %vm346, %v345, 0
    %351 = vmatpush.msra.mxu0 0.0
    %352 = vmatpush.msra.mxu0 0.0
    %353 = vmatpush.msra.mxu0 0.0
    %354 = vmatpush.msra.mxu0 0.0
    %355 = vmatpush.msra.mxu0 0.0
    %356 = vmatpush.msra.mxu0 0.0
    %357 = vmatpush.msra.mxu0 0.0
    %358 = vmatpush.msra.mxu0 0.0
    %359 = vmatpush.msra.mxu0 0.0
    %360 = vmatpush.msra.mxu0 0.0
    %361 = vmatpush.msra.mxu0 0.0
    %362 = vmatpush.msra.mxu0 0.0
    %363 = vmatpush.msra.mxu0 0.0
    %364 = vmatpush.msra.mxu0 0.0
    %365 = vmatpush.msra.mxu0 0.0
    %366 = vmatpush.msra.mxu0 %v340
    %367 = vmatmul.f32.gmra.mxu0 %v347
    %v368 = vpop.f32.mrf.mxu0
    %v369 = vadd.f32 0.0, %v368
    %370 = vmatmul.f32.gmra.mxu0 %v349
    %v371 = vpop.f32.mrf.mxu0
    %v372 = vadd.f32 0.0, %v371
    %373 = vdwg.mxu0
    %v374 = vsel %vm346, %v269, 0
    %v376 = vsel %vm346, %v270, 0
    %378 = vmatpush.msra.mxu0 0.0
    %379 = vmatpush.msra.mxu0 0.0
    %380 = vmatpush.msra.mxu0 0.0
    %381 = vmatpush.msra.mxu0 0.0
    %382 = vmatpush.msra.mxu0 0.0
    %383 = vmatpush.msra.mxu0 0.0
    %384 = vmatpush.msra.mxu0 0.0
    %385 = vmatpush.msra.mxu0 0.0
    %386 = vmatpush.msra.mxu0 0.0
    %387 = vmatpush.msra.mxu0 0.0
    %388 = vmatpush.msra.mxu0 0.0
    %389 = vmatpush.msra.mxu0 0.0
    %390 = vmatpush.msra.mxu0 0.0
    %391 = vmatpush.msra.mxu0 0.0
    %392 = vmatpush.msra.mxu0 0.0
    %393 = vmatpush.msra.mxu0 %v338
    %394 = vmatmul.f32.gmra.mxu0 %v374
    %v395 = vpop.f32.mrf.mxu0
    %v396 = vadd.f32 0.0, %v395
    %397 = vmatmul.f32.gmra.mxu0 %v376
    %v398 = vpop.f32.mrf.mxu0
    %v399 = vadd.f32 0.0, %v398
    %400 = vdwg.mxu0
    %v401 = vld [vmem:[#allocation17] sm:$0xff]
    %vm402 = vcmask 31744
    %v404 = vsel %vm402, %v369, 0
    %v407 = vsel %vm402, %v372, 0
    %vm409 = vcmask 1043456
    %v411 = vsel %vm409, %v341, 0
    %413 = vmatpush.msra.mxu0 0.0
    %414 = vmatpush.msra.mxu0 0.0
    %415 = vmatpush.msra.mxu0 0.0
    %416 = vmatpush.msra.mxu0 0.0
    %417 = vmatpush.msra.mxu0 0.0
    %418 = vmatpush.msra.mxu0 0.0
    %419 = vmatpush.msra.mxu0 0.0
    %420 = vmatpush.msra.mxu0 0.0
    %421 = vmatpush.msra.mxu0 0.0
    %422 = vmatpush.msra.mxu0 0.0
    %423 = vmatpush.msra.mxu0 0.0
    %424 = vmatpush.msra.mxu0 0.0
    %425 = vmatpush.msra.mxu0 0.0
    %426 = vmatpush.msra.mxu0 0.0
    %427 = vmatpush.msra.mxu0 0.0
    %428 = vmatpush.msra.mxu0 %v411
    %429 = vmatmul.f32.gmra.mxu0 %v404
    %v430 = vpop.f32.mrf.mxu0
    %v431 = vadd.f32 0.0, %v430
    %432 = vmatmul.f32.gmra.mxu0 %v407
    %v433 = vpop.f32.mrf.mxu0
    %v434 = vadd.f32 0.0, %v433
    %435 = vdwg.mxu0
    %436 = vmatpush.msra.mxu0 0.0
    %437 = vmatpush.msra.mxu0 0.0
    %438 = vmatpush.msra.mxu0 0.0
    %439 = vmatpush.msra.mxu0 0.0
    %440 = vmatpush.msra.mxu0 0.0
    %441 = vmatpush.msra.mxu0 0.0
    %442 = vmatpush.msra.mxu0 0.0
    %443 = vmatpush.msra.mxu0 0.0
    %444 = vmatpush.msra.mxu0 0.0
    %445 = vmatpush.msra.mxu0 0.0
    %446 = vmatpush.msra.mxu0 0.0
    %447 = vmatpush.msra.mxu0 0.0
    %448 = vmatpush.msra.mxu0 0.0
    %449 = vmatpush.msra.mxu0 0.0
    %450 = vmatpush.msra.mxu0 0.0
    %451 = vmatpush.msra.mxu0 %v401
    %452 = vmatmul.f32.gmra.mxu0 %v374
    %v453 = vpop.f32.mrf.mxu0
    %v454 = vadd.f32 %v431, %v453
    %455 = vmatmul.f32.gmra.mxu0 %v376
    %v456 = vpop.f32.mrf.mxu0
    %v457 = vadd.f32 %v434, %v456
    %458 = vdwg.mxu0
    %v459 = vld [vmem:[#allocation19] sm:$0xff]
    %460 = vmatpush.msra.mxu0 0.0
    %461 = vmatpush.msra.mxu0 0.0
    %462 = vmatpush.msra.mxu0 0.0
    %463 = vmatpush.msra.mxu0 0.0
    %464 = vmatpush.msra.mxu0 0.0
    %465 = vmatpush.msra.mxu0 0.0
    %466 = vmatpush.msra.mxu0 0.0
    %467 = vmatpush.msra.mxu0 0.0
    %468 = vmatpush.msra.mxu0 0.0
    %469 = vmatpush.msra.mxu0 0.0
    %470 = vmatpush.msra.mxu0 0.0
    %471 = vmatpush.msra.mxu0 0.0
    %472 = vmatpush.msra.mxu0 0.0
    %473 = vmatpush.msra.mxu0 0.0
    %474 = vmatpush.msra.mxu0 0.0
    %475 = vmatpush.msra.mxu0 %v459
    %476 = vmatmul.f32.gmra.mxu0 %v347
    %v477 = vpop.f32.mrf.mxu0
    %v478 = vadd.f32 0.0, %v477
    %479 = vmatmul.f32.gmra.mxu0 %v349
    %v480 = vpop.f32.mrf.mxu0
    %v481 = vadd.f32 0.0, %v480
    %482 = vdwg.mxu0
    %v484 = vsel %vm402, %v396, 0
    %v487 = vsel %vm402, %v399, 0
    %v490 = vsel %vm409, %v339, 0
    %492 = vmatpush.msra.mxu0 0.0
    %493 = vmatpush.msra.mxu0 0.0
    %494 = vmatpush.msra.mxu0 0.0
    %495 = vmatpush.msra.mxu0 0.0
    %496 = vmatpush.msra.mxu0 0.0
    %497 = vmatpush.msra.mxu0 0.0
    %498 = vmatpush.msra.mxu0 0.0
    %499 = vmatpush.msra.mxu0 0.0
    %500 = vmatpush.msra.mxu0 0.0
    %501 = vmatpush.msra.mxu0 0.0
    %502 = vmatpush.msra.mxu0 0.0
    %503 = vmatpush.msra.mxu0 0.0
    %504 = vmatpush.msra.mxu0 0.0
    %505 = vmatpush.msra.mxu0 0.0
    %506 = vmatpush.msra.mxu0 0.0
    %507 = vmatpush.msra.mxu0 %v490
    %508 = vmatmul.f32.gmra.mxu0 %v484
    %v509 = vpop.f32.mrf.mxu0
    %v510 = vadd.f32 %v478, %v509
    %511 = vmatmul.f32.gmra.mxu0 %v487
    %v512 = vpop.f32.mrf.mxu0
    %v513 = vadd.f32 %v481, %v512
    %514 = vdwg.mxu0
    %517 = vrot.lane.b32.xlu0 %v510, 8
    %v518 = vpop.permute.xlu0 %517
    %519 = vrot.lane.b32.xlu0 %v513, 8
    %v520 = vpop.permute.xlu0 %519
    %v523 = vsel %vm346, %v454, %v518
    %v524 = vsel %vm346, %v457, %v520
    %v526 = vsel %vm402, %v306, 0
    %v529 = vsel %vm402, %v309, 0
    %v532 = vsel %vm409, %v276, 0
    %534 = vmatpush.msra.mxu0 0.0
    %535 = vmatpush.msra.mxu0 0.0
    %536 = vmatpush.msra.mxu0 0.0
    %537 = vmatpush.msra.mxu0 0.0
    %538 = vmatpush.msra.mxu0 0.0
    %539 = vmatpush.msra.mxu0 0.0
    %540 = vmatpush.msra.mxu0 0.0
    %541 = vmatpush.msra.mxu0 0.0
    %542 = vmatpush.msra.mxu0 0.0
    %543 = vmatpush.msra.mxu0 0.0
    %544 = vmatpush.msra.mxu0 0.0
    %545 = vmatpush.msra.mxu0 0.0
    %546 = vmatpush.msra.mxu0 0.0
    %547 = vmatpush.msra.mxu0 0.0
    %548 = vmatpush.msra.mxu0 0.0
    %549 = vmatpush.msra.mxu0 %v532
    %550 = vmatmul.f32.gmra.mxu0 %v526
    %v551 = vpop.f32.mrf.mxu0
    %v552 = vadd.f32 0.0, %v551
    %553 = vmatmul.f32.gmra.mxu0 %v529
    %v554 = vpop.f32.mrf.mxu0
    %v555 = vadd.f32 0.0, %v554
    %556 = vdwg.mxu0
    %v557 = vadd.f32 %v523, %v552
    %v558 = vadd.f32 %v524, %v555
    %v559 = vld [vmem:[#allocation20] sm:$0xff]
    %v560 = vld [vmem:[#allocation22] sm:$0xf]
    %v561 = vld [vmem:[#allocation23] sm:$0xff]
    %v562 = vld [vmem:[#allocation25] sm:$0xf]
    %563 = vrot.lane.b32.xlu0 %v269, 104
    %v564 = vpop.permute.xlu0 %563
    %565 = vrot.lane.b32.xlu0 %v270, 104
    %v566 = vpop.permute.xlu0 %565
    %v567 = vsel %vm346, %v564, 0
    %v569 = vsel %vm346, %v566, 0
    %571 = vmatpush.msra.mxu0 0.0
    %572 = vmatpush.msra.mxu0 0.0
    %573 = vmatpush.msra.mxu0 0.0
    %574 = vmatpush.msra.mxu0 0.0
    %575 = vmatpush.msra.mxu0 0.0
    %576 = vmatpush.msra.mxu0 0.0
    %577 = vmatpush.msra.mxu0 0.0
    %578 = vmatpush.msra.mxu0 0.0
    %579 = vmatpush.msra.mxu0 0.0
    %580 = vmatpush.msra.mxu0 0.0
    %581 = vmatpush.msra.mxu0 0.0
    %582 = vmatpush.msra.mxu0 0.0
    %583 = vmatpush.msra.mxu0 0.0
    %584 = vmatpush.msra.mxu0 0.0
    %585 = vmatpush.msra.mxu0 0.0
    %586 = vmatpush.msra.mxu0 %v561
    %587 = vmatmul.f32.gmra.mxu0 %v567
    %v588 = vpop.f32.mrf.mxu0
    %v589 = vadd.f32 0.0, %v588
    %590 = vmatmul.f32.gmra.mxu0 %v569
    %v591 = vpop.f32.mrf.mxu0
    %v592 = vadd.f32 0.0, %v591
    %593 = vdwg.mxu0
    %v594 = vsel %vm346, %v280, 0
    %v596 = vsel %vm346, %v282, 0
    %598 = vmatpush.msra.mxu0 0.0
    %599 = vmatpush.msra.mxu0 0.0
    %600 = vmatpush.msra.mxu0 0.0
    %601 = vmatpush.msra.mxu0 0.0
    %602 = vmatpush.msra.mxu0 0.0
    %603 = vmatpush.msra.mxu0 0.0
    %604 = vmatpush.msra.mxu0 0.0
    %605 = vmatpush.msra.mxu0 0.0
    %606 = vmatpush.msra.mxu0 0.0
    %607 = vmatpush.msra.mxu0 0.0
    %608 = vmatpush.msra.mxu0 0.0
    %609 = vmatpush.msra.mxu0 0.0
    %610 = vmatpush.msra.mxu0 0.0
    %611 = vmatpush.msra.mxu0 0.0
    %612 = vmatpush.msra.mxu0 0.0
    %613 = vmatpush.msra.mxu0 %v559
    %614 = vmatmul.f32.gmra.mxu0 %v594
    %v615 = vpop.f32.mrf.mxu0
    %v616 = vadd.f32 0.0, %v615
    %617 = vmatmul.f32.gmra.mxu0 %v596
    %v618 = vpop.f32.mrf.mxu0
    %v619 = vadd.f32 0.0, %v618
    %620 = vdwg.mxu0
    %v621 = vld [vmem:[%s15] sm:$0xff]
    %v623 = vsel %vm402, %v589, 0
    %v626 = vsel %vm402, %v592, 0
    %v629 = vsel %vm409, %v562, 0
    %631 = vmatpush.msra.mxu0 0.0
    %632 = vmatpush.msra.mxu0 0.0
    %633 = vmatpush.msra.mxu0 0.0
    %634 = vmatpush.msra.mxu0 0.0
    %635 = vmatpush.msra.mxu0 0.0
    %636 = vmatpush.msra.mxu0 0.0
    %637 = vmatpush.msra.mxu0 0.0
    %638 = vmatpush.msra.mxu0 0.0
    %639 = vmatpush.msra.mxu0 0.0
    %640 = vmatpush.msra.mxu0 0.0
    %641 = vmatpush.msra.mxu0 0.0
    %642 = vmatpush.msra.mxu0 0.0
    %643 = vmatpush.msra.mxu0 0.0
    %644 = vmatpush.msra.mxu0 0.0
    %645 = vmatpush.msra.mxu0 0.0
    %646 = vmatpush.msra.mxu0 %v629
    %647 = vmatmul.f32.gmra.mxu0 %v623
    %v648 = vpop.f32.mrf.mxu0
    %v649 = vadd.f32 0.0, %v648
    %650 = vmatmul.f32.gmra.mxu0 %v626
    %v651 = vpop.f32.mrf.mxu0
    %v652 = vadd.f32 0.0, %v651
    %653 = vdwg.mxu0
    %654 = vmatpush.msra.mxu0 0.0
    %655 = vmatpush.msra.mxu0 0.0
    %656 = vmatpush.msra.mxu0 0.0
    %657 = vmatpush.msra.mxu0 0.0
    %658 = vmatpush.msra.mxu0 0.0
    %659 = vmatpush.msra.mxu0 0.0
    %660 = vmatpush.msra.mxu0 0.0
    %661 = vmatpush.msra.mxu0 0.0
    %662 = vmatpush.msra.mxu0 0.0
    %663 = vmatpush.msra.mxu0 0.0
    %664 = vmatpush.msra.mxu0 0.0
    %665 = vmatpush.msra.mxu0 0.0
    %666 = vmatpush.msra.mxu0 0.0
    %667 = vmatpush.msra.mxu0 0.0
    %668 = vmatpush.msra.mxu0 0.0
    %669 = vmatpush.msra.mxu0 %v621
    %670 = vmatmul.f32.gmra.mxu0 %v594
    %v671 = vpop.f32.mrf.mxu0
    %v672 = vadd.f32 %v649, %v671
    %673 = vmatmul.f32.gmra.mxu0 %v596
    %v674 = vpop.f32.mrf.mxu0
    %v675 = vadd.f32 %v652, %v674
    %676 = vdwg.mxu0
    %v677 = vld [vmem:[%s16] sm:$0xff]
    %678 = vmatpush.msra.mxu0 0.0
    %679 = vmatpush.msra.mxu0 0.0
    %680 = vmatpush.msra.mxu0 0.0
    %681 = vmatpush.msra.mxu0 0.0
    %682 = vmatpush.msra.mxu0 0.0
    %683 = vmatpush.msra.mxu0 0.0
    %684 = vmatpush.msra.mxu0 0.0
    %685 = vmatpush.msra.mxu0 0.0
    %686 = vmatpush.msra.mxu0 0.0
    %687 = vmatpush.msra.mxu0 0.0
    %688 = vmatpush.msra.mxu0 0.0
    %689 = vmatpush.msra.mxu0 0.0
    %690 = vmatpush.msra.mxu0 0.0
    %691 = vmatpush.msra.mxu0 0.0
    %692 = vmatpush.msra.mxu0 0.0
    %693 = vmatpush.msra.mxu0 %v677
    %694 = vmatmul.f32.gmra.mxu0 %v567
    %v695 = vpop.f32.mrf.mxu0
    %v696 = vadd.f32 0.0, %v695
    %697 = vmatmul.f32.gmra.mxu0 %v569
    %v698 = vpop.f32.mrf.mxu0
    %v699 = vadd.f32 0.0, %v698
    %700 = vdwg.mxu0
    %v702 = vsel %vm402, %v616, 0
    %v705 = vsel %vm402, %v619, 0
    %v708 = vsel %vm409, %v560, 0
    %710 = vmatpush.msra.mxu0 0.0
    %711 = vmatpush.msra.mxu0 0.0
    %712 = vmatpush.msra.mxu0 0.0
    %713 = vmatpush.msra.mxu0 0.0
    %714 = vmatpush.msra.mxu0 0.0
    %715 = vmatpush.msra.mxu0 0.0
    %716 = vmatpush.msra.mxu0 0.0
    %717 = vmatpush.msra.mxu0 0.0
    %718 = vmatpush.msra.mxu0 0.0
    %719 = vmatpush.msra.mxu0 0.0
    %720 = vmatpush.msra.mxu0 0.0
    %721 = vmatpush.msra.mxu0 0.0
    %722 = vmatpush.msra.mxu0 0.0
    %723 = vmatpush.msra.mxu0 0.0
    %724 = vmatpush.msra.mxu0 0.0
    %725 = vmatpush.msra.mxu0 %v708
    %726 = vmatmul.f32.gmra.mxu0 %v702
    %v727 = vpop.f32.mrf.mxu0
    %v728 = vadd.f32 %v696, %v727
    %729 = vmatmul.f32.gmra.mxu0 %v705
    %v730 = vpop.f32.mrf.mxu0
    %v731 = vadd.f32 %v699, %v730
    %732 = vdwg.mxu0
    %735 = vrot.lane.b32.xlu0 %v728, 8
    %v736 = vpop.permute.xlu0 %735
    %737 = vrot.lane.b32.xlu0 %v731, 8
    %v738 = vpop.permute.xlu0 %737
    %v741 = vsel %vm346, %v672, %v736
    %v742 = vsel %vm346, %v675, %v738
    %v744 = vsel %vm402, %v333, 0
    %v747 = vsel %vm402, %v336, 0
    %v750 = vsel %vm409, %v273, 0
    %752 = vmatpush.msra.mxu0 0.0
    %753 = vmatpush.msra.mxu0 0.0
    %754 = vmatpush.msra.mxu0 0.0
    %755 = vmatpush.msra.mxu0 0.0
    %756 = vmatpush.msra.mxu0 0.0
    %757 = vmatpush.msra.mxu0 0.0
    %758 = vmatpush.msra.mxu0 0.0
    %759 = vmatpush.msra.mxu0 0.0
    %760 = vmatpush.msra.mxu0 0.0
    %761 = vmatpush.msra.mxu0 0.0
    %762 = vmatpush.msra.mxu0 0.0
    %763 = vmatpush.msra.mxu0 0.0
    %764 = vmatpush.msra.mxu0 0.0
    %765 = vmatpush.msra.mxu0 0.0
    %766 = vmatpush.msra.mxu0 0.0
    %767 = vmatpush.msra.mxu0 %v750
    %768 = vmatmul.f32.gmra.mxu0 %v744
    %v769 = vpop.f32.mrf.mxu0
    %v770 = vadd.f32 %v741, %v769
    %771 = vmatmul.f32.gmra.mxu0 %v747
    %v772 = vpop.f32.mrf.mxu0
    %v773 = vadd.f32 %v742, %v772
    %774 = vdwg.mxu0
    %777 = vrot.lane.b32.xlu0 %v770, 16
    %v778 = vpop.permute.xlu0 %777
    %779 = vrot.lane.b32.xlu0 %v773, 16
    %v780 = vpop.permute.xlu0 %779
    %v783 = vsel %vm283, %v557, %v778
    %v784 = vsel %vm283, %v558, %v780
    %v785 = vld [vmem:[%s17] sm:$0x1]
    %v787 = vperm.slane %v785, 0
    %v789 = vadd.f32 %v783, %v787
    %v790 = vadd.f32 %v784, %v787
    %vm791 = vcmask 261120
    %792 = vst.msk [vmem:[#allocation26] sm:$0xff] %vm791, %v789
    %793 = vst.msk [vmem:[#allocation26 + $0x8] sm:$0xff] %vm791, %v790
    // Predicated region
    $region134: #{_lambda_.1} parent=1 // pred_check
      _
    $region135: #{_lambda_.1} parent=1 // pred_check_branch
      %795 = sbr.rel (0) target = $region137
    $region136: #{_lambda_.1} parent=1 // pred_region
      %797 = vsyncadd [#allocation4], 0
      %s798 = sshll.u32 [#allocation26], 4
      %s799 = int_to_ptr.vmem [resolvable:$true] %s798
      %s800 = sshll.u32 %s18, 4
      %s801 = int_to_ptr.hbm [resolvable:$true] %s800
      %806 = dma.vmem_to_hbm [thread:$0]  %s799, 256, %s801, [#allocation4], 128, 128, 8
    $region137: #{_lambda_.1} parent=1 // pred_fallthru
      _
    // Predicated region
    $region138: #{_lambda_.1} parent=1 // pred_check
      _
    $region139: #{_lambda_.1} parent=1 // pred_check_branch
      %808 = sbr.rel (0) target = $region141
    $region140: #{_lambda_.1} parent=1 // pred_region
      %810 = dma.done [#allocation4], 256
    $region141: #{_lambda_.1} parent=1 // pred_fallthru
      _
    %811 = vsyncpa [#allocation3], 1
    %812 = vsyncpa [#allocation6], 1
    %813 = vsyncpa [#allocation9], 1
    %814 = vsyncpa [#allocation12], 1
    %815 = vsyncpa [#allocation15], 1
    %816 = vsyncpa [#allocation18], 1
    %817 = vsyncpa [#allocation21], 1
    %818 = vsyncpa [#allocation24], 1
    %819 = vsyncpa [#allocation4], 1

</llo_original>
